<compile_context>
chip_gen: v5e
topology: v5e:2x2
jax: 0.10.0
libtpu: 0.0.40
codegen_flags: <defaults>
</compile_context>

<pallas_src>
import math

import jax
import jax.numpy as jnp
from jax.experimental import pallas as pl
from jax.experimental.pallas import tpu as pltpu


# ------------------------------ Pallas kernel -------------------------------


def _out_conv_kernel(x_ref, w_ref, b_ref, o_ref):
    """1x1 conv (Cin=128 -> Cout=1) + sigmoid for one (batch, spatial) tile.

    x_ref : (1, C, THW)  VMEM; C on sublanes, pixels on lanes
    w_ref : (1, C)       VMEM; conv weight (Cout=1 row), grid-resident
    b_ref : (1, 1)       SMEM; conv bias (scalar)
    o_ref : (1, 1, THW)  VMEM; lane-dense output slab (THW multiple of 128)
    """
    x = x_ref[0]                                               # (C, THW)
    # (1, C) x (C, THW) -> (1, THW): K=128 fills the MXU contraction dim and
    # the output lane dim (THW) is lane-dense (unmasked vst).
    y = jnp.dot(w_ref[...], x, preferred_element_type=jnp.float32)
    y = y + b_ref[0, 0]                                        # scalar bias
    # Exact sigmoid: exp on the EUP, one (negligible) exact divide.
    o_ref[0] = 1.0 / (1.0 + jnp.exp(-y))


# ------------------------------ Pallas wrapper -------------------------------


# 4 MiB f32 per input block (128 x 8192); 8 MiB double-buffered — fits every
# generation's scoped-VMEM default and amortizes per-step overhead everywhere.
_THW_CAP = 8192


def _pick_thw(hw):
    """Largest spatial tile <= cap that divides HW and is a multiple of 128."""
    if hw <= _THW_CAP:
        return hw
    t = (_THW_CAP // 128) * 128
    while t >= 128:
        if hw % t == 0:
            return t
        t -= 128
    # TODO(synk): HW > cap with no 128-multiple divisor -> single big block.
    return hw


@jax.jit
def pallas_out_conv(x_nchw, w, b):
    """x_nchw: (N, 128, H, W) f32; w: (1, 128, 1, 1) PyTorch OIHW; b: (1,)."""
    N, C, H, W = x_nchw.shape
    HW = H * W
    THW = _pick_thw(HW)
    n_hw = HW // THW

    x = x_nchw.reshape(N, C, HW)            # metadata-only reshape
    w2 = w.reshape(1, C)                    # (Cout=1, Cin, 1, 1) -> (1, C)
    b2 = b.reshape(1, 1)

    cost = pl.CostEstimate(
        flops=2 * N * C * HW,
        transcendentals=N * HW,
        bytes_accessed=4 * N * C * HW + 4 * N * HW + 4 * C,
    )

    out = pl.pallas_call(
        _out_conv_kernel,
        grid=(N, n_hw),
        in_specs=[
            pl.BlockSpec((1, C, THW), lambda n, t: (n, 0, t)),
            pl.BlockSpec((1, C), lambda n, t: (0, 0)),
            pl.BlockSpec(memory_space=pltpu.SMEM),      # bias -> scalar path
        ],
        out_specs=pl.BlockSpec((1, 1, THW), lambda n, t: (n, 0, t)),
        out_shape=jax.ShapeDtypeStruct((N, 1, HW), jnp.float32),
        compiler_params=pltpu.CompilerParams(
            dimension_semantics=("parallel", "parallel")),  # both TCs on v7x
        cost_estimate=cost,
    )(x, w2, b2)
    return out.reshape(N, 1, H, W)          # metadata-only reshape back


# --------------------- pure-JAX reference (for validation) ------------------


def ref_out_conv(x_nchw, w, b):
    y = jnp.einsum("nchw,oc->nohw", x_nchw, w.reshape(1, -1))
    y = y + b.reshape(1, -1, 1, 1)
    return jax.nn.sigmoid(y)


# ----------------------------------- main ------------------------------------


if __name__ == "__main__":
    root = jax.random.PRNGKey(0)
    kx, kw, kb = jax.random.split(root, 3)

    N, C, H, W = 2, 128, 16, 16             # Conv2d hard-codes Cin=128, Cout=1
    x = jax.random.normal(kx, (N, C, H, W), jnp.float32)

    # PyTorch Conv2d default init: U(-1/sqrt(fan_in), 1/sqrt(fan_in)), fan_in=C
    bound = 1.0 / math.sqrt(C)
    w = jax.random.uniform(kw, (1, C, 1, 1), jnp.float32,
                           minval=-bound, maxval=bound)
    b = jax.random.uniform(kb, (1,), jnp.float32, minval=-bound, maxval=bound)

    out = jax.block_until_ready(pallas_out_conv(x, w, b))
    ref = jax.block_until_ready(ref_out_conv(x, w, b))

    assert out.shape == (N, 1, H, W), out.shape
    assert bool(jnp.all(jnp.isfinite(out)))
    assert bool(jnp.allclose(out, ref, rtol=1e-5, atol=1e-5)), \
        float(jnp.max(jnp.abs(out - ref)))
    print("KERNEL_OK")
</pallas_src>

<mosaic_0001>
module attributes {stable_mosaic.version = 11 : i64} {
  func.func @_out_conv_kernel(%arg0: i32, %arg1: i32, %arg2: memref<1x128x256xf32, #tpu.memory_space<vmem>>, %arg3: memref<1x128xf32, #tpu.memory_space<vmem>>, %arg4: memref<1x1xf32, #tpu.memory_space<smem>>, %arg5: memref<1x1x256xf32, #tpu.memory_space<vmem>>) attributes {dimension_semantics = [#tpu.dimension_semantics<parallel>, #tpu.dimension_semantics<parallel>], iteration_bounds = array<i64: 2, 1>, scalar_prefetch = 0 : i64, scratch_operands = 0 : i64, tpu.core_type = #tpu.core_type<tc>, window_params = [{transform_indices = @transform_0, window_bounds = array<i64: 1, 128, 256>}, {pipeline_mode = #tpu.pipeline_mode<synchronous>, transform_indices = @transform_1, window_bounds = array<i64: 1, 128>}, {transform_indices = @transform_2, window_bounds = array<i64: 1, 1>}, {transform_indices = @transform_3, window_bounds = array<i64: 1, 1, 256>}]} {
    %c0 = arith.constant 0 : index
    %c0_0 = arith.constant 0 : index
    %c0_1 = arith.constant 0 : index
    %0 = vector.load %arg2[%c0, %c0_0, %c0_1] : memref<1x128x256xf32, #tpu.memory_space<vmem>>, vector<1x128x256xf32>
    %1 = vector.shape_cast %0 : vector<1x128x256xf32> to vector<128x256xf32>
    %c0_2 = arith.constant 0 : index
    %c0_3 = arith.constant 0 : index
    %2 = vector.load %arg3[%c0_2, %c0_3] : memref<1x128xf32, #tpu.memory_space<vmem>>, vector<1x128xf32>
    %cst = arith.constant dense<0.000000e+00> : vector<1x256xf32>
    %3 = tpu.matmul %2, %1, %cst {dimension_numbers = #tpu.dot_dimension_numbers<[1], [0], [0], [1], [0, 0, 1, 1], [], []>} : vector<1x128xf32>, vector<128x256xf32>, vector<1x256xf32> -> vector<1x256xf32>
    %c0_4 = arith.constant 0 : index
    %c0_5 = arith.constant 0 : index
    %4 = memref.load %arg4[%c0_4, %c0_5] : memref<1x1xf32, #tpu.memory_space<smem>>
    %5 = vector.broadcast %4 : f32 to vector<1x256xf32>
    %6 = arith.addf %3, %5 : vector<1x256xf32>
    %cst_6 = arith.constant 0.000000e+00 : f32
    %7 = vector.broadcast %cst_6 : f32 to vector<1x256xf32>
    %8 = arith.subf %7, %6 : vector<1x256xf32>
    %9 = math.exp %8 : vector<1x256xf32>
    %cst_7 = arith.constant 1.000000e+00 : f32
    %10 = vector.broadcast %cst_7 : f32 to vector<1x256xf32>
    %11 = arith.addf %10, %9 : vector<1x256xf32>
    %cst_8 = arith.constant 1.000000e+00 : f32
    %12 = vector.broadcast %cst_8 : f32 to vector<1x256xf32>
    %13 = arith.divf %12, %11 : vector<1x256xf32>
    %c0_9 = arith.constant 0 : index
    %c0_10 = arith.constant 0 : index
    %c0_11 = arith.constant 0 : index
    %14 = vector.load %arg5[%c0_9, %c0_10, %c0_11] : memref<1x1x256xf32, #tpu.memory_space<vmem>>, vector<1x1x256xf32>
    %15 = vector.shape_cast %14 : vector<1x1x256xf32> to vector<1x256xf32>
    %16 = vector.shape_cast %13 : vector<1x256xf32> to vector<1x1x256xf32>
    tpu.vector_store %arg5[%c0_9, %c0_10, %c0_11], %16 {strides = array<i32>} : memref<1x1x256xf32, #tpu.memory_space<vmem>>, vector<1x1x256xf32>,
    return
  }
  func.func @transform_0(%arg0: i32, %arg1: i32) -> (i32, i32, i32) {
    %c0_i32 = arith.constant 0 : i32
    %c0_i32_0 = arith.constant 0 : i32
    return %arg0, %c0_i32, %arg1 : i32, i32, i32
  }
  func.func @transform_1(%arg0: i32, %arg1: i32) -> (i32, i32) {
    %c0_i32 = arith.constant 0 : i32
    %c0_i32_0 = arith.constant 0 : i32
    %c0_i32_1 = arith.constant 0 : i32
    return %c0_i32, %c0_i32_0 : i32, i32
  }
  func.func @transform_2(%arg0: i32, %arg1: i32) -> (i32, i32) {
    %c0_i32 = arith.constant 0 : i32
    %c0_i32_0 = arith.constant 0 : i32
    %c0_i32_1 = arith.constant 0 : i32
    return %c0_i32, %c0_i32_0 : i32, i32
  }
  func.func @transform_3(%arg0: i32, %arg1: i32) -> (i32, i32, i32) {
    %c0_i32 = arith.constant 0 : i32
    %c0_i32_0 = arith.constant 0 : i32
    return %arg0, %c0_i32, %arg1 : i32, i32, i32
  }
}

</mosaic_0001>

<llo_original>
// kernel: pallas_out_conv.1
$region0: #{pallas_out_conv.1}
  #allocation0 [shape = 'u32[]', space=smem, size = 0x4, offset = 0x4, fixed_abs, tag = 'smem constant byte address 0x4 - core index']
  #allocation1 [shape = 'u32[72,128]{1,0:T(1,128)}', space=vmem, size = 0x9000, scoped, tag = 'internal scratch']
  #allocation2 [shape = 'f32[1,1]{1,0:T(1,128)S(6)}', space=smem, size = 0x200, scoped, tag = 'scoped memory for pallas_out_conv.1']
  %s0 = inlined_call_operand.vmem [shape: f32[2,128,256], index: 0, kind: input, shape index: {}]
  %s1 = inlined_call_operand.vmem [shape: f32[1,128], index: 1, kind: input, shape index: {}]
  %s2 = inlined_call_operand.<no memory space> [shape: f32[1,1], index: 2, kind: input, shape index: {}]
  %s3 = inlined_call_operand.vmem [shape: f32[2,1,256], index: 3, kind: output, shape index: {}]
  %s4 = sld [smem:[#allocation0]]
  $region45: #{pallas_out_conv.1} parent=0
    _
  %s6 = ssub.s32 1, %s4
  %s7 = scalar_select 0, %s6, %s4
  %8 = sst [smem:[#allocation2]] %s2
  loop: start=0, step=1, limit=4
  $region2: #{pallas_out_conv.1} parent=0 // loop_pre_header
    _
  $region3: #{pallas_out_conv.1} parent=0 // loop_header
    %s10 = sphi 0, %s14
    %p11 = scmp.ge.s32.totalorder %s10, 4
    %s17 = sphi 0, %s29
    %s18 = sphi 0, %s25
    %s19 = sphi 0, %s17
    %s20 = sphi 0, %s18
    %s21 = sphi 0, %s19
    %s22 = sphi 0, %s20
    %s34 = sphi 0, %s36
    %s37 = sphi 0, %s34
    %s38 = sphi 0, %s37
    %s54 = sphi 0, %s38
    %s58 = sphi 0, %s58
    %s60 = sphi 0, %s58
    %s61 = sphi 0, %s60
    %s75 = sphi 0, %s61
    %s79 = sphi 0, %s79
    %s81 = sphi 0, %s79
    %s82 = sphi 0, %s81
    %s96 = sphi 0, %s82
    %s104 = sphi 0, %s106
    %s107 = sphi 0, %s104
    %s108 = sphi 0, %s107
    %s124 = sphi 0, %s108
  $region4: #{pallas_out_conv.1} parent=0 // loop_header_branch
    %13 = sbr.rel (%p11) target = $region8
  $region5: #{pallas_out_conv.1} parent=0 // loop_body
    %s15 = ssub.s32 %s10, 1
    %s16 = ssub.s32 %s10, 2
    %s23 = sadd.s32 1, %s18
    %p24 = scmp.ge.s32.totalorder %s23, 1
    %s25 = scalar_select %p24, 0, %s23
    %s26 = sadd.s32 1, %s17
    %s27 = scalar_select %p24, %s26, %s17
    %p28 = scmp.ge.s32.totalorder %s27, 2
    %s29 = scalar_select %p28, 0, %s27
    %s30 = ssub.s32 %s17, %s29
    %s31 = ssub.s32 %s18, %s25
    %s32 = sor.u32 %s30, %s31
    %p33 = scmp.eq.s32.totalorder %s32, 0
    %s35 = sadd.s32 %s34, 1
    %s36 = scalar_select %p33, %s34, %s35
    %p39 = pneg %p33
    %p40 = scmp.eq.s32.totalorder %s10, 1
    %p41 = por %p39, %p40
    %p42 = scmp.ne.s32.totalorder %s34, %s37
    %p43 = scmp.eq.s32.totalorder %s10, 0
    %p44 = por %p42, %p43
    %p45 = scmp.ne.s32.totalorder %s34, %s37
    %p46 = scmp.eq.s32.totalorder %s15, 1
    %p47 = por %p45, %p46
    %p48 = scmp.ne.s32.totalorder %s37, %s38
    %p49 = scmp.eq.s32.totalorder %s15, 0
    %p50 = por %p48, %p49
    %p51 = scmp.ne.s32.totalorder %s37, %s38
    %p52 = scmp.eq.s32.totalorder %s16, 1
    %p53 = por %p51, %p52
    %p55 = scmp.ne.s32.totalorder %s38, %s54
    %p56 = scmp.eq.s32.totalorder %s16, 0
    %p57 = por %p55, %p56
    %s59 = sadd.s32 %s58, 1
    %p62 = scmp.eq.s32.totalorder %s10, 1
    %p63 = scmp.ne.s32.totalorder %s58, %s60
    %p64 = scmp.eq.s32.totalorder %s10, 0
    %p65 = por %p63, %p64
    %p66 = scmp.ne.s32.totalorder %s58, %s60
    %p67 = scmp.eq.s32.totalorder %s15, 1
    %p68 = por %p66, %p67
    %p69 = scmp.ne.s32.totalorder %s60, %s61
    %p70 = scmp.eq.s32.totalorder %s15, 0
    %p71 = por %p69, %p70
    %p72 = scmp.ne.s32.totalorder %s60, %s61
    %p73 = scmp.eq.s32.totalorder %s16, 1
    %p74 = por %p72, %p73
    %p76 = scmp.ne.s32.totalorder %s61, %s75
    %p77 = scmp.eq.s32.totalorder %s16, 0
    %p78 = por %p76, %p77
    %s80 = sadd.s32 %s79, 1
    %p83 = scmp.eq.s32.totalorder %s10, 1
    %p84 = scmp.ne.s32.totalorder %s79, %s81
    %p85 = scmp.eq.s32.totalorder %s10, 0
    %p86 = por %p84, %p85
    %p87 = scmp.ne.s32.totalorder %s79, %s81
    %p88 = scmp.eq.s32.totalorder %s15, 1
    %p89 = por %p87, %p88
    %p90 = scmp.ne.s32.totalorder %s81, %s82
    %p91 = scmp.eq.s32.totalorder %s15, 0
    %p92 = por %p90, %p91
    %p93 = scmp.ne.s32.totalorder %s81, %s82
    %p94 = scmp.eq.s32.totalorder %s16, 1
    %p95 = por %p93, %p94
    %p97 = scmp.ne.s32.totalorder %s82, %s96
    %p98 = scmp.eq.s32.totalorder %s16, 0
    %p99 = por %p97, %p98
    %s100 = ssub.s32 %s17, %s29
    %s101 = ssub.s32 %s18, %s25
    %s102 = sor.u32 %s100, %s101
    %p103 = scmp.eq.s32.totalorder %s102, 0
    %s105 = sadd.s32 %s104, 1
    %s106 = scalar_select %p103, %s104, %s105
    %p109 = pneg %p103
    %p110 = scmp.eq.s32.totalorder %s10, 1
    %p111 = por %p109, %p110
    %p112 = scmp.ne.s32.totalorder %s104, %s107
    %p113 = scmp.eq.s32.totalorder %s10, 0
    %p114 = por %p112, %p113
    %p115 = scmp.ne.s32.totalorder %s104, %s107
    %p116 = scmp.eq.s32.totalorder %s15, 1
    %p117 = por %p115, %p116
    %p118 = scmp.ne.s32.totalorder %s107, %s108
    %p119 = scmp.eq.s32.totalorder %s15, 0
    %p120 = por %p118, %p119
    %p121 = scmp.ne.s32.totalorder %s107, %s108
    %p122 = scmp.eq.s32.totalorder %s16, 1
    %p123 = por %p121, %p122
    %p125 = scmp.ne.s32.totalorder %s108, %s124
    %p126 = scmp.eq.s32.totalorder %s16, 0
    %p127 = por %p125, %p126
    %p128 = scmp.le.s32.totalorder 1, %s10
    %p129 = scmp.lt.s32.totalorder %s10, 3
    %p130 = pnand %p128, %p129
    %p131 = pneg %p130
    // Predicated region
    $region9: #{pallas_out_conv.1} parent=5 // pred_check
      _
    $region10: #{pallas_out_conv.1} parent=5 // pred_check_branch
      %133 = sbr.rel (%p130) target = $region12
    $region11: #{pallas_out_conv.1} parent=5 // pred_region
      %s134 = ssub.s32 %s10, 1
      // Predicated region
      $region13: #{pallas_out_conv.1} parent=11 // pred_check
        %p135 = pneg %p71
      $region14: #{pallas_out_conv.1} parent=11 // pred_check_branch
        %137 = sbr.rel (%p135) target = $region16
      $region15: #{pallas_out_conv.1} parent=11 // pred_region
        _
      $region16: #{pallas_out_conv.1} parent=11 // pred_fallthru
        _
      // Predicated region
      $region17: #{pallas_out_conv.1} parent=11 // pred_check
        %p138 = pneg %p92
      $region18: #{pallas_out_conv.1} parent=11 // pred_check_branch
        %140 = sbr.rel (%p138) target = $region20
      $region19: #{pallas_out_conv.1} parent=11 // pred_region
        _
      $region20: #{pallas_out_conv.1} parent=11 // pred_fallthru
        _
    $region12: #{pallas_out_conv.1} parent=5 // pred_fallthru
      _
    %p141 = scmp.lt.s32.totalorder %s10, 2
    // Predicated region
    $region21: #{pallas_out_conv.1} parent=5 // pred_check
      %p142 = pneg %p141
    $region22: #{pallas_out_conv.1} parent=5 // pred_check_branch
      %144 = sbr.rel (%p142) target = $region24
    $region23: #{pallas_out_conv.1} parent=5 // pred_region
      // Predicated region
      $region25: #{pallas_out_conv.1} parent=23 // pred_check
        %p145 = pneg %p44
      $region26: #{pallas_out_conv.1} parent=23 // pred_check_branch
        %147 = sbr.rel (%p145) target = $region28
      $region27: #{pallas_out_conv.1} parent=23 // pred_region
        %s148 = smul.u32 2, %s18
        %p149 = scmp.lt.s32.totalorder %s17, 1
        %s150 = scalar_select %p149, %s17, 1
        %p151 = scmp.lt.s32.totalorder %s148, 1
        %s152 = scalar_select %p151, %s148, 1
        %s153 = smul.addr %s150, 32
        %s154 = sadd.s32 %s152, %s153
        %s155 = smul.addr %s154, 8
        %s156 = scalar_lea.vmem %s0, %s155
        %s157 = smul.u32 2, %s18
      $region28: #{pallas_out_conv.1} parent=23 // pred_fallthru
        _
    $region24: #{pallas_out_conv.1} parent=5 // pred_fallthru
      _
    %p158 = scmp.le.s32.totalorder 1, %s10
    %p159 = scmp.lt.s32.totalorder %s10, 3
    %p160 = pnand %p158, %p159
    %p161 = pneg %p160
    // Predicated region
    $region29: #{pallas_out_conv.1} parent=5 // pred_check
      _
    $region30: #{pallas_out_conv.1} parent=5 // pred_check_branch
      %163 = sbr.rel (%p160) target = $region32
    $region31: #{pallas_out_conv.1} parent=5 // pred_region
      %s164 = ssub.s32 %s10, 1
      %s165 = smul.u32 2, %s20
      %p166 = scmp.lt.s32.totalorder %s19, 1
      %s167 = scalar_select %p166, %s19, 1
      %p168 = scmp.lt.s32.totalorder %s165, 1
      %s169 = scalar_select %p168, %s165, 1
      %s170 = smul.addr %s167, 32
      %s171 = sadd.s32 %s169, %s170
      %s172 = smul.addr %s171, 8
      %s173 = scalar_lea.vmem %s0, %s172
      %p174 = pneg %p50
      %p175 = pneg %p47
      %p176 = pneg %p71
      %p177 = pneg %p68
      %p178 = pneg %p92
      %p179 = pneg %p89
      %p180 = pneg %p120
      %p181 = pneg %p117
      %s182 = smul.u32 2, %s20
      %p183 = scmp.lt.s32.totalorder %s19, 1
      %s184 = scalar_select %p183, %s19, 1
      %p185 = scmp.lt.s32.totalorder %s182, 1
      %s186 = scalar_select %p185, %s182, 1
      %s187 = smul.addr %s184, 2
      %s188 = sadd.s32 %s186, %s187
      %s189 = scalar_lea.vmem %s3, %s188
      %s190 = smul.u32 2, %s20
      %p191 = scmp.lt.s32.totalorder %s19, 1
      %s192 = scalar_select %p191, %s19, 1
      %p193 = scmp.lt.s32.totalorder %s190, 1
      %s194 = scalar_select %p193, %s190, 1
      %s195 = smul.addr %s192, 32
      %s196 = sadd.s32 %s194, %s195
      %s197 = smul.addr %s196, 8
      %s198 = scalar_lea.vmem %s0, %s197
      %s199 = smul.u32 2, %s20
      %s200 = smul.u32 2, %s20
      %p201 = scmp.lt.s32.totalorder %s19, 1
      %s202 = scalar_select %p201, %s19, 1
      %p203 = scmp.lt.s32.totalorder %s200, 1
      %s204 = scalar_select %p203, %s200, 1
      %s205 = smul.addr %s202, 2
      %s206 = sadd.s32 %s204, %s205
      %s207 = scalar_lea.vmem %s3, %s206
      %s208 = smul.u32 2, %s20
      %v209 = vld [vmem:[%s198] sm:$0xff]
      %v210 = vld [vmem:[%s198 + $0x8] sm:$0xff]
      %v211 = vld [vmem:[%s198 + $0x10] sm:$0xff]
      %v212 = vld [vmem:[%s198 + $0x18] sm:$0xff]
      %v213 = vld [vmem:[%s198 + $0x20] sm:$0xff]
      %v214 = vld [vmem:[%s198 + $0x28] sm:$0xff]
      %v215 = vld [vmem:[%s198 + $0x30] sm:$0xff]
      %v216 = vld [vmem:[%s198 + $0x38] sm:$0xff]
      %v217 = vld [vmem:[%s198 + $0x40] sm:$0xff]
      %v218 = vld [vmem:[%s198 + $0x48] sm:$0xff]
      %v219 = vld [vmem:[%s198 + $0x50] sm:$0xff]
      %v220 = vld [vmem:[%s198 + $0x58] sm:$0xff]
      %v221 = vld [vmem:[%s198 + $0x60] sm:$0xff]
      %v222 = vld [vmem:[%s198 + $0x68] sm:$0xff]
      %v223 = vld [vmem:[%s198 + $0x70] sm:$0xff]
      %v224 = vld [vmem:[%s198 + $0x78] sm:$0xff]
      %v225 = vld [vmem:[%s198 + $0x80] sm:$0xff]
      %v226 = vld [vmem:[%s198 + $0x88] sm:$0xff]
      %v227 = vld [vmem:[%s198 + $0x90] sm:$0xff]
      %v228 = vld [vmem:[%s198 + $0x98] sm:$0xff]
      %v229 = vld [vmem:[%s198 + $0xa0] sm:$0xff]
      %v230 = vld [vmem:[%s198 + $0xa8] sm:$0xff]
      %v231 = vld [vmem:[%s198 + $0xb0] sm:$0xff]
      %v232 = vld [vmem:[%s198 + $0xb8] sm:$0xff]
      %v233 = vld [vmem:[%s198 + $0xc0] sm:$0xff]
      %v234 = vld [vmem:[%s198 + $0xc8] sm:$0xff]
      %v235 = vld [vmem:[%s198 + $0xd0] sm:$0xff]
      %v236 = vld [vmem:[%s198 + $0xd8] sm:$0xff]
      %v237 = vld [vmem:[%s198 + $0xe0] sm:$0xff]
      %v238 = vld [vmem:[%s198 + $0xe8] sm:$0xff]
      %v239 = vld [vmem:[%s198 + $0xf0] sm:$0xff]
      %v240 = vld [vmem:[%s198 + $0xf8] sm:$0xff]
      %v241 = vld [vmem:[%s1] sm:$0x1]
      %s242 = sld [smem:[#allocation2]]
      %v243 = vstv %s242
      %244 = vmatpush.msra.mxu0 %v239
      %245 = vmatpush.msra.mxu0 %v237
      %246 = vmatpush.msra.mxu0 %v235
      %247 = vmatpush.msra.mxu0 %v233
      %248 = vmatpush.msra.mxu0 %v231
      %249 = vmatpush.msra.mxu0 %v229
      %250 = vmatpush.msra.mxu0 %v227
      %251 = vmatpush.msra.mxu0 %v225
      %252 = vmatpush.msra.mxu0 %v223
      %253 = vmatpush.msra.mxu0 %v221
      %254 = vmatpush.msra.mxu0 %v219
      %255 = vmatpush.msra.mxu0 %v217
      %256 = vmatpush.msra.mxu0 %v215
      %257 = vmatpush.msra.mxu0 %v213
      %258 = vmatpush.msra.mxu0 %v211
      %259 = vmatpush.msra.mxu0 %v209
      %260 = vmatmul.f32.gmra.mxu0 %v241
      %v261 = vpop.f32.mrf.mxu0
      %v262 = vadd.f32 %v243, %v261
      %263 = vdwg.mxu0
      %264 = vmatpush.msra.mxu0 %v240
      %265 = vmatpush.msra.mxu0 %v238
      %266 = vmatpush.msra.mxu0 %v236
      %267 = vmatpush.msra.mxu0 %v234
      %268 = vmatpush.msra.mxu0 %v232
      %269 = vmatpush.msra.mxu0 %v230
      %270 = vmatpush.msra.mxu0 %v228
      %271 = vmatpush.msra.mxu0 %v226
      %272 = vmatpush.msra.mxu0 %v224
      %273 = vmatpush.msra.mxu0 %v222
      %274 = vmatpush.msra.mxu0 %v220
      %275 = vmatpush.msra.mxu0 %v218
      %276 = vmatpush.msra.mxu0 %v216
      %277 = vmatpush.msra.mxu0 %v214
      %278 = vmatpush.msra.mxu0 %v212
      %279 = vmatpush.msra.mxu0 %v210
      %280 = vmatmul.f32.gmra.mxu0 %v241
      %v281 = vpop.f32.mrf.mxu0
      %v282 = vadd.f32 %v243, %v281
      %283 = vdwg.mxu0
      %v284 = vsub.f32 0.0, %v262
      %v285 = vsub.f32 0.0, %v282
      %v286 = vmul.f32 %v284, 1.442695
      %v287 = vpow.pop %v286
      %v288 = vmul.f32 %v285, 1.442695
      %v289 = vpow.pop %v288
      %v290 = vadd.f32 %v287, 1.0
      %v291 = vadd.f32 %v289, 1.0
      %v292 = vrcp.pop %v290
      %v293 = vmul.f32 %v290, %v292
      %v294 = vsub.f32 1.0, %v293
      %v295 = vmul.f32 %v292, %v294
      %v296 = vadd.f32 %v292, %v295
      %vm297 = vweird.f32 %v290
      %vm298 = vweird.f32 %v292
      %vm299 = vmor %vm297, %vm298
      %v300 = vsel %vm299, %v292, %v296
      %v301 = vand.u32 2147483647, %v290
      %vm302 = vcmp.eq.f32.partialorder %v301, 8.507059e+37
      %v303 = vand.u32 %v290, 2147483648
      %v304 = vor.u32 1.1754944e-38, %v303
      %v305 = vsel %vm302, %v304, %v300
      %v306 = vmul.f32 1.0, %v305
      %v307 = vrcp.pop %v291
      %v308 = vmul.f32 %v291, %v307
      %v309 = vsub.f32 1.0, %v308
      %v310 = vmul.f32 %v307, %v309
      %v311 = vadd.f32 %v307, %v310
      %vm312 = vweird.f32 %v291
      %vm313 = vweird.f32 %v307
      %vm314 = vmor %vm312, %vm313
      %v315 = vsel %vm314, %v307, %v311
      %v316 = vand.u32 2147483647, %v291
      %vm317 = vcmp.eq.f32.partialorder %v316, 8.507059e+37
      %v318 = vand.u32 %v291, 2147483648
      %v319 = vor.u32 1.1754944e-38, %v318
      %v320 = vsel %vm317, %v319, %v315
      %v321 = vmul.f32 1.0, %v320
      %v324 = vrot.slane %v321, 7
      %vm325 = vcmask 1040384
      %v326 = vsel %vm325, %v306, %v324
      %v328 = vlaneseq
      %vm329 = vcmp.ge.s32.totalorder %v328, 0
      %vm330 = vcmp.lt.s32.totalorder %v328, 256
      %vm331 = vmand %vm329, %vm330
      %332 = vst.msk [vmem:[%s207] sm:$0x3] %vm331, %v326
      %s333 = smul.u32 2, %s20
      %p334 = scmp.lt.s32.totalorder %s19, 1
      %s335 = scalar_select %p334, %s19, 1
      %p336 = scmp.lt.s32.totalorder %s333, 1
      %s337 = scalar_select %p336, %s333, 1
      %s338 = smul.addr %s335, 2
      %s339 = sadd.s32 %s337, %s338
      %s340 = scalar_lea.vmem %s3, %s339
      // Predicated region
      $region33: #{pallas_out_conv.1} parent=31 // pred_check
        %p341 = pneg %p117
      $region34: #{pallas_out_conv.1} parent=31 // pred_check_branch
        %343 = sbr.rel (%p341) target = $region36
      $region35: #{pallas_out_conv.1} parent=31 // pred_region
        %s344 = smul.u32 2, %s20
      $region36: #{pallas_out_conv.1} parent=31 // pred_fallthru
        _
    $region32: #{pallas_out_conv.1} parent=5 // pred_fallthru
      _
    %p345 = scmp.le.s32.totalorder 2, %s10
    // Predicated region
    $region37: #{pallas_out_conv.1} parent=5 // pred_check
      %p346 = pneg %p345
    $region38: #{pallas_out_conv.1} parent=5 // pred_check_branch
      %348 = sbr.rel (%p346) target = $region40
    $region39: #{pallas_out_conv.1} parent=5 // pred_region
      %s349 = ssub.s32 %s10, 2
      // Predicated region
      $region41: #{pallas_out_conv.1} parent=39 // pred_check
        %p350 = pneg %p123
      $region42: #{pallas_out_conv.1} parent=39 // pred_check_branch
        %352 = sbr.rel (%p350) target = $region44
      $region43: #{pallas_out_conv.1} parent=39 // pred_region
        %s353 = smul.u32 2, %s22
        %p354 = scmp.lt.s32.totalorder %s21, 1
        %s355 = scalar_select %p354, %s21, 1
        %p356 = scmp.lt.s32.totalorder %s353, 1
        %s357 = scalar_select %p356, %s353, 1
        %s358 = smul.addr %s355, 2
        %s359 = sadd.s32 %s357, %s358
        %s360 = scalar_lea.vmem %s3, %s359
      $region44: #{pallas_out_conv.1} parent=39 // pred_fallthru
        _
    $region40: #{pallas_out_conv.1} parent=5 // pred_fallthru
      _
  $region6: #{pallas_out_conv.1} parent=0 // loop_footer
    %s14 = sadd.s32 1, %s10
  $region7: #{pallas_out_conv.1} parent=0 // loop_footer_branch
    %9 = sbr.rel target = $region3
  $region8: #{pallas_out_conv.1} parent=0 // loop_exit
    _

</llo_original>
